<compile_context>
chip_gen: v5e
topology: v5e:2x2
jax: 0.10.0
libtpu: 0.0.40
codegen_flags: <defaults>
</compile_context>

<pallas_src>
import functools
import math

import jax
import jax.numpy as jnp
from jax.experimental import pallas as pl
from jax.experimental.pallas import tpu as pltpu

_LANE = 128
_TILE_VMEM_BUDGET = 8 * 1024 * 1024   # in + out tiles, double-buffered
_MAX_BLOCK_ROWS = 4096


def _ln_rowwise_kernel(x_ref, gamma_ref, beta_ref, o_ref, *, eps):
    """Standard path (d_model >= 128 or not lane-packable). Tile = (bm, d_model)."""
    x = x_ref[...].astype(jnp.float32)
    mean = jnp.mean(x, axis=-1, keepdims=True)
    centered = x - mean
    var = jnp.mean(centered * centered, axis=-1, keepdims=True)  # unbiased=False
    inv_std = jax.lax.rsqrt(var + eps)
    out = gamma_ref[...].astype(jnp.float32) * (centered * inv_std) \
        + beta_ref[...].astype(jnp.float32)
    o_ref[...] = out.astype(o_ref.dtype)


def _ln_packed_kernel(x_ref, gamma_ref, beta_ref, seg_ref, o_ref, *, eps, inv_d):
    """Lane-dense path: each 128-wide row of the tile holds `pack` logical rows of
    width d_model.  Per-segment sums are computed on the MXU with a block-diagonal
    ones matrix (exact 0/1 weights, HIGHEST precision), so loads/stores stay
    unmasked and no cross-lane relayout is needed."""
    x = x_ref[...].astype(jnp.float32)
    seg = seg_ref[...]
    mean = jnp.dot(x, seg, preferred_element_type=jnp.float32,
                   precision=jax.lax.Precision.HIGHEST) * inv_d
    centered = x - mean
    var = jnp.dot(centered * centered, seg, preferred_element_type=jnp.float32,
                  precision=jax.lax.Precision.HIGHEST) * inv_d
    inv_std = jax.lax.rsqrt(var + eps)
    out = gamma_ref[...].astype(jnp.float32) * (centered * inv_std) \
        + beta_ref[...].astype(jnp.float32)
    o_ref[...] = out.astype(o_ref.dtype)


def _pick_block_rows(rows, width, itemsize, requested):
    """Largest row tile that (a) fits the VMEM budget (in + out, double-buffered),
    (b) keeps sublane-aligned tiles for the dtype, and (c) divides `rows` so the
    wrapper never has to pad.  Returns 0 if no aligned divisor exists."""
    row_align = max(8, 8 * (4 // max(itemsize, 1)))  # 8 for f32, 16 for bf16, 32 for int8
    per_row = 4 * width * itemsize                   # 2 bufs x (in + out)
    cap = max(row_align, min(_MAX_BLOCK_ROWS, _TILE_VMEM_BUDGET // per_row))
    if requested is not None:
        cap = min(cap, max(1, requested))
    if rows <= cap:
        return rows                                  # full extent is always a legal block
    start = (cap // row_align) * row_align
    for b in range(start, 0, -row_align):
        if rows % b == 0:
            return b
    return 0


def layer_norm(x, gamma, beta, eps=1e-12, block_rows=None):
    """LayerNorm over the last dim of x.  x: (..., d_model); gamma, beta: (d_model,)."""
    orig_shape = x.shape
    d = orig_shape[-1]
    rows = math.prod(orig_shape[:-1])
    itemsize = jnp.dtype(x.dtype).itemsize

    # Lane-dense packing for narrow feature dims (e.g. d_model=32 -> pack 4 rows / vreg row).
    pack = 1
    if d < _LANE and _LANE % d == 0 and rows % (_LANE // d) == 0:
        pack = _LANE // d
    # TODO(synk): for d_model < 128 with 128 % d_model != 0 (or ragged row counts), a
    # gather-based repack would still allow lane-dense I/O; we fall back to the (correct)
    # narrow masked-store path instead.
    width = d * pack
    prows = rows // pack
    xp = x.reshape(prows, width)                     # contiguous reshape: free view, no copy

    gamma_p = jnp.tile(gamma.reshape(1, d), (1, pack))
    beta_p = jnp.tile(beta.reshape(1, d), (1, pack))

    bm = _pick_block_rows(prows, width, itemsize, block_rows)
    pad = 0
    if bm == 0:
        # Rare fallback (row count with no aligned divisor <= cap): pad the tail.
        bm = max(8, ((_TILE_VMEM_BUDGET // (4 * width * itemsize)) // 8) * 8)
        bm = min(bm, _MAX_BLOCK_ROWS)
        pad = pl.cdiv(prows, bm) * bm - prows
        xp = jnp.pad(xp, ((0, pad), (0, 0)))

    grid = (pl.cdiv(prows + pad, bm),)
    compiler_params = pltpu.CompilerParams(
        dimension_semantics=("parallel",),           # lets v7x split the row grid over 2 TCs
        vmem_limit_bytes=32 * 1024 * 1024,           # headroom; safe on v5e/v6e/v7x
    )

    n_elems = (prows + pad) * width
    cost = pl.CostEstimate(
        flops=8 * n_elems + (4 * n_elems * width if pack > 1 else 0),
        transcendentals=(prows + pad) * pack,
        bytes_accessed=2 * n_elems * itemsize + 2 * width * 4,
    )

    if pack > 1:
        # Block-diagonal ones matrix: (x @ seg)[r, j] = sum of x[r, :] within j's segment.
        lane = jnp.arange(width)
        seg = (lane[:, None] // d == lane[None, :] // d).astype(jnp.float32)
        kernel = functools.partial(_ln_packed_kernel, eps=float(eps), inv_d=1.0 / float(d))
        in_specs = [
            pl.BlockSpec((bm, width), lambda i: (i, 0)),
            pl.BlockSpec((1, width), lambda i: (0, 0)),      # resident: not re-DMA'd per step
            pl.BlockSpec((1, width), lambda i: (0, 0)),
            pl.BlockSpec((width, width), lambda i: (0, 0)),
        ]
        args = (xp, gamma_p, beta_p, seg)
    else:
        kernel = functools.partial(_ln_rowwise_kernel, eps=float(eps))
        in_specs = [
            pl.BlockSpec((bm, width), lambda i: (i, 0)),
            pl.BlockSpec((1, width), lambda i: (0, 0)),
            pl.BlockSpec((1, width), lambda i: (0, 0)),
        ]
        args = (xp, gamma_p, beta_p)

    out = pl.pallas_call(
        kernel,
        out_shape=jax.ShapeDtypeStruct((prows + pad, width), x.dtype),
        grid_spec=pltpu.PrefetchScalarGridSpec(
            num_scalar_prefetch=0,
            grid=grid,
            in_specs=in_specs,
            out_specs=pl.BlockSpec((bm, width), lambda i: (i, 0)),
        ),
        compiler_params=compiler_params,
        cost_estimate=cost,
    )(*args)

    if pad:
        out = out[:prows]
    return out.reshape(orig_shape)


if __name__ == "__main__":
    key = jax.random.PRNGKey(0)

    # --- Module shapes: d_model=32, input (batch=2, seq=8, d_model) -> lane-packed path.
    d_model = 32
    batch, seq = 2, 8
    x = jax.random.normal(key, (batch, seq, d_model), dtype=jnp.float32)
    gamma = jnp.ones((d_model,), dtype=jnp.float32)   # nn.Parameter(torch.ones(d_model))
    beta = jnp.zeros((d_model,), dtype=jnp.float32)   # nn.Parameter(torch.zeros(d_model))

    out = layer_norm(x, gamma, beta, eps=1e-12)
    out = jax.block_until_ready(out)

    mean = jnp.mean(x, axis=-1, keepdims=True)
    var = jnp.mean((x - mean) ** 2, axis=-1, keepdims=True)
    ref = gamma * (x - mean) / jnp.sqrt(var + 1e-12) + beta
    assert out.shape == x.shape and out.dtype == x.dtype
    assert jnp.allclose(out, ref, atol=1e-5, rtol=1e-5), float(jnp.max(jnp.abs(out - ref)))

    # --- Secondary check: d_model >= 128 exercises the standard (non-packed) path.
    k1, k2, k3 = jax.random.split(jax.random.PRNGKey(1), 3)
    d2, b2, s2 = 128, 4, 16
    x2 = jax.random.normal(k1, (b2, s2, d2), dtype=jnp.float32)
    g2 = 1.0 + 0.1 * jax.random.normal(k2, (d2,), dtype=jnp.float32)
    be2 = 0.1 * jax.random.normal(k3, (d2,), dtype=jnp.float32)
    out2 = jax.block_until_ready(layer_norm(x2, g2, be2, eps=1e-12))
    m2 = jnp.mean(x2, axis=-1, keepdims=True)
    v2 = jnp.mean((x2 - m2) ** 2, axis=-1, keepdims=True)
    ref2 = g2 * (x2 - m2) / jnp.sqrt(v2 + 1e-12) + be2
    assert jnp.allclose(out2, ref2, atol=1e-5, rtol=1e-5), float(jnp.max(jnp.abs(out2 - ref2)))

    print("KERNEL_OK")
</pallas_src>

<mosaic_0001>
module attributes {stable_mosaic.version = 11 : i64} {
  func.func @_ln_packed_kernel(%arg0: i32, %arg1: memref<4x128xf32, #tpu.memory_space<vmem>>, %arg2: memref<1x128xf32, #tpu.memory_space<vmem>>, %arg3: memref<1x128xf32, #tpu.memory_space<vmem>>, %arg4: memref<128x128xf32, #tpu.memory_space<vmem>>, %arg5: memref<4x128xf32, #tpu.memory_space<vmem>>) attributes {dimension_semantics = [#tpu.dimension_semantics<parallel>], iteration_bounds = array<i64: 1>, scalar_prefetch = 0 : i64, scratch_operands = 0 : i64, tpu.core_type = #tpu.core_type<tc>, window_params = [{transform_indices = @transform_0, window_bounds = array<i64: 4, 128>}, {pipeline_mode = #tpu.pipeline_mode<synchronous>, transform_indices = @transform_1, window_bounds = array<i64: 1, 128>}, {pipeline_mode = #tpu.pipeline_mode<synchronous>, transform_indices = @transform_2, window_bounds = array<i64: 1, 128>}, {pipeline_mode = #tpu.pipeline_mode<synchronous>, transform_indices = @transform_3, window_bounds = array<i64: 128, 128>}, {transform_indices = @transform_4, window_bounds = array<i64: 4, 128>}]} {
    %c0 = arith.constant 0 : index
    %c0_0 = arith.constant 0 : index
    %0 = vector.load %arg1[%c0, %c0_0] : memref<4x128xf32, #tpu.memory_space<vmem>>, vector<4x128xf32>
    %c0_1 = arith.constant 0 : index
    %c0_2 = arith.constant 0 : index
    %1 = vector.load %arg4[%c0_1, %c0_2] : memref<128x128xf32, #tpu.memory_space<vmem>>, vector<128x128xf32>
    %cst = arith.constant dense<0.000000e+00> : vector<4x128xf32>
    %2 = tpu.matmul %0, %1, %cst {dimension_numbers = #tpu.dot_dimension_numbers<[1], [0], [0], [1], [0, 0, 1, 1], [], []>, precision = #tpu.contract_precision<fp32>} : vector<4x128xf32>, vector<128x128xf32>, vector<4x128xf32> -> vector<4x128xf32>
    %cst_3 = arith.constant 3.125000e-02 : f32
    %3 = vector.broadcast %cst_3 : f32 to vector<4x128xf32>
    %4 = arith.mulf %2, %3 : vector<4x128xf32>
    %5 = arith.subf %0, %4 : vector<4x128xf32>
    %6 = arith.mulf %5, %5 : vector<4x128xf32>
    %cst_4 = arith.constant dense<0.000000e+00> : vector<4x128xf32>
    %7 = tpu.matmul %6, %1, %cst_4 {dimension_numbers = #tpu.dot_dimension_numbers<[1], [0], [0], [1], [0, 0, 1, 1], [], []>, precision = #tpu.contract_precision<fp32>} : vector<4x128xf32>, vector<128x128xf32>, vector<4x128xf32> -> vector<4x128xf32>
    %cst_5 = arith.constant 3.125000e-02 : f32
    %8 = vector.broadcast %cst_5 : f32 to vector<4x128xf32>
    %9 = arith.mulf %7, %8 : vector<4x128xf32>
    %cst_6 = arith.constant 9.99999996E-13 : f32
    %10 = vector.broadcast %cst_6 : f32 to vector<4x128xf32>
    %11 = arith.addf %9, %10 : vector<4x128xf32>
    %12 = math.rsqrt %11 : vector<4x128xf32>
    %c0_7 = arith.constant 0 : index
    %c0_8 = arith.constant 0 : index
    %13 = vector.load %arg2[%c0_7, %c0_8] : memref<1x128xf32, #tpu.memory_space<vmem>>, vector<1x128xf32>
    %14 = arith.mulf %5, %12 : vector<4x128xf32>
    %15 = vector.broadcast %13 : vector<1x128xf32> to vector<4x128xf32>
    %16 = arith.mulf %15, %14 : vector<4x128xf32>
    %c0_9 = arith.constant 0 : index
    %c0_10 = arith.constant 0 : index
    %17 = vector.load %arg3[%c0_9, %c0_10] : memref<1x128xf32, #tpu.memory_space<vmem>>, vector<1x128xf32>
    %18 = vector.broadcast %17 : vector<1x128xf32> to vector<4x128xf32>
    %19 = arith.addf %16, %18 : vector<4x128xf32>
    %c0_11 = arith.constant 0 : index
    %c0_12 = arith.constant 0 : index
    %20 = vector.load %arg5[%c0_11, %c0_12] : memref<4x128xf32, #tpu.memory_space<vmem>>, vector<4x128xf32>
    tpu.vector_store %arg5[%c0_11, %c0_12], %19 {strides = array<i32>} : memref<4x128xf32, #tpu.memory_space<vmem>>, vector<4x128xf32>,
    return
  }
  func.func @transform_0(%arg0: i32) -> (i32, i32) {
    %c0_i32 = arith.constant 0 : i32
    %c0_i32_0 = arith.constant 0 : i32
    return %arg0, %c0_i32 : i32, i32
  }
  func.func @transform_1(%arg0: i32) -> (i32, i32) {
    %c0_i32 = arith.constant 0 : i32
    %c0_i32_0 = arith.constant 0 : i32
    %c0_i32_1 = arith.constant 0 : i32
    return %c0_i32, %c0_i32_0 : i32, i32
  }
  func.func @transform_2(%arg0: i32) -> (i32, i32) {
    %c0_i32 = arith.constant 0 : i32
    %c0_i32_0 = arith.constant 0 : i32
    %c0_i32_1 = arith.constant 0 : i32
    return %c0_i32, %c0_i32_0 : i32, i32
  }
  func.func @transform_3(%arg0: i32) -> (i32, i32) {
    %c0_i32 = arith.constant 0 : i32
    %c0_i32_0 = arith.constant 0 : i32
    %c0_i32_1 = arith.constant 0 : i32
    return %c0_i32, %c0_i32_0 : i32, i32
  }
  func.func @transform_4(%arg0: i32) -> (i32, i32) {
    %c0_i32 = arith.constant 0 : i32
    %c0_i32_0 = arith.constant 0 : i32
    return %arg0, %c0_i32 : i32, i32
  }
}

</mosaic_0001>

<llo_original>
// kernel: tpu_custom_call.1
$region0: #{tpu_custom_call.1}
  #allocation0 [shape = 'u32[]', space=smem, size = 0x4, offset = 0x4, fixed_abs, tag = 'smem constant byte address 0x4 - core index']
  #allocation1 [shape = 'u32[72,128]{1,0:T(1,128)}', space=vmem, size = 0x9000, scoped, tag = 'internal scratch']
  %s0 = inlined_call_operand.hbm [shape: f32[4,128], index: 0, kind: input, shape index: {}]
  %s1 = inlined_call_operand.hbm [shape: f32[1,128], index: 1, kind: input, shape index: {}]
  %s2 = inlined_call_operand.vmem [shape: f32[1,128], index: 2, kind: input, shape index: {}]
  %s3 = inlined_call_operand.hbm [shape: f32[128,128], index: 3, kind: input, shape index: {}]
  %s4 = inlined_call_operand.hbm [shape: f32[4,128], index: 4, kind: output, shape index: {}]
  %s5 = sld [smem:[#allocation0]]
  $region38: #{tpu_custom_call.1} parent=0
    _
  %s7 = ssub.s32 1, %s5
  %s8 = scalar_select 0, %s7, %s5
  $region1: #{tpu_custom_call.1} parent=0
    #allocation2 [shape = 'u8[2048]{0}', space=vmem, size = 0x800, scoped, tag = 'input window, operand 0, single buffered']
    #allocation3 [shape = 's32[1]{0}', space=sflag, size = 0x4, scoped, tag = 'scoped memory for tpu_custom_call.1']
    #allocation4 [shape = 's32[1]{0}', space=sflag, size = 0x4, scoped, tag = 'scoped memory for tpu_custom_call.1']
    #allocation5 [shape = 'u8[512]{0}', space=vmem, size = 0x400, scoped, tag = 'input window, operand 1, single buffered']
    #allocation6 [shape = 's32[1]{0}', space=sflag, size = 0x4, scoped, tag = 'scoped memory for tpu_custom_call.1']
    #allocation7 [shape = 'u8[65536]{0}', space=vmem, size = 0x10000, scoped, tag = 'input window, operand 3, single buffered']
    #allocation8 [shape = 'u8[2048]{0}', space=vmem, size = 0x800, scoped, tag = 'output window, operand 0, single buffered']
    %9 = vsyncpa [#allocation3], 0
    %10 = vsyncpa [#allocation6], 0
    %11 = vsyncpa [#allocation4], 0
    // Predicated region
    $region2: #{tpu_custom_call.1} parent=1 // pred_check
      _
    $region3: #{tpu_custom_call.1} parent=1 // pred_check_branch
      %13 = sbr.rel (0) target = $region5
    $region4: #{tpu_custom_call.1} parent=1 // pred_region
      %15 = vsyncadd [#allocation3], 0
      %s17 = sshll.u32 %s0, 4
      %s18 = int_to_ptr.hbm [resolvable:$true] %s17
      %s19 = sshll.u32 [#allocation2], 4
      %s20 = int_to_ptr.vmem [resolvable:$true] %s19
      %22 = dma.hbm_to_vmem [thread:$0]  %s18, 64, %s20, [#allocation3]
    $region5: #{tpu_custom_call.1} parent=1 // pred_fallthru
      _
    // Predicated region
    $region6: #{tpu_custom_call.1} parent=1 // pred_check
      _
    $region7: #{tpu_custom_call.1} parent=1 // pred_check_branch
      %24 = sbr.rel (0) target = $region9
    $region8: #{tpu_custom_call.1} parent=1 // pred_region
      %26 = vsyncadd [#allocation6], 0
      %s28 = sshll.u32 %s1, 4
      %s29 = int_to_ptr.hbm [resolvable:$true] %s28
      %s30 = sshll.u32 [#allocation5], 4
      %s31 = int_to_ptr.vmem [resolvable:$true] %s30
      %33 = dma.hbm_to_vmem [thread:$0]  %s29, 16, %s31, [#allocation6]
    $region9: #{tpu_custom_call.1} parent=1 // pred_fallthru
      _
    // Predicated region
    $region10: #{tpu_custom_call.1} parent=1 // pred_check
      _
    $region11: #{tpu_custom_call.1} parent=1 // pred_check_branch
      %35 = sbr.rel (0) target = $region13
    $region12: #{tpu_custom_call.1} parent=1 // pred_region
      _
    $region13: #{tpu_custom_call.1} parent=1 // pred_fallthru
      _
    // Predicated region
    $region14: #{tpu_custom_call.1} parent=1 // pred_check
      _
    $region15: #{tpu_custom_call.1} parent=1 // pred_check_branch
      %37 = sbr.rel (0) target = $region17
    $region16: #{tpu_custom_call.1} parent=1 // pred_region
      %39 = vsyncadd [#allocation6], 0
      %s40 = sshll.u32 %s3, 4
      %s41 = int_to_ptr.hbm [resolvable:$true] %s40
      %s42 = sshll.u32 [#allocation7], 4
      %s43 = int_to_ptr.vmem [resolvable:$true] %s42
      %48 = dma.hbm_to_vmem [thread:$0]  %s41, 2048, %s43, [#allocation6], 128, 128, 8
    $region17: #{tpu_custom_call.1} parent=1 // pred_fallthru
      _
    // Predicated region
    $region18: #{tpu_custom_call.1} parent=1 // pred_check
      _
    $region19: #{tpu_custom_call.1} parent=1 // pred_check_branch
      %50 = sbr.rel (0) target = $region21
    $region20: #{tpu_custom_call.1} parent=1 // pred_region
      %52 = dma.done [#allocation3], 64
    $region21: #{tpu_custom_call.1} parent=1 // pred_fallthru
      _
    // Predicated region
    $region22: #{tpu_custom_call.1} parent=1 // pred_check
      _
    $region23: #{tpu_custom_call.1} parent=1 // pred_check_branch
      %54 = sbr.rel (0) target = $region25
    $region24: #{tpu_custom_call.1} parent=1 // pred_region
      %56 = dma.done [#allocation6], 16
    $region25: #{tpu_custom_call.1} parent=1 // pred_fallthru
      _
    // Predicated region
    $region26: #{tpu_custom_call.1} parent=1 // pred_check
      _
    $region27: #{tpu_custom_call.1} parent=1 // pred_check_branch
      %58 = sbr.rel (0) target = $region29
    $region28: #{tpu_custom_call.1} parent=1 // pred_region
      %60 = dma.done [#allocation6], 2048
    $region29: #{tpu_custom_call.1} parent=1 // pred_fallthru
      _
    %v61 = vld [vmem:[#allocation2] sm:$0xf]
    %v62 = vld [vmem:[#allocation7] sm:$0xff]
    %v63 = vld [vmem:[#allocation7 + $0x8] sm:$0xff]
    %v64 = vld [vmem:[#allocation7 + $0x10] sm:$0xff]
    %v65 = vld [vmem:[#allocation7 + $0x18] sm:$0xff]
    %v66 = vld [vmem:[#allocation7 + $0x20] sm:$0xff]
    %v67 = vld [vmem:[#allocation7 + $0x28] sm:$0xff]
    %v68 = vld [vmem:[#allocation7 + $0x30] sm:$0xff]
    %v69 = vld [vmem:[#allocation7 + $0x38] sm:$0xff]
    %v70 = vld [vmem:[#allocation7 + $0x40] sm:$0xff]
    %v71 = vld [vmem:[#allocation7 + $0x48] sm:$0xff]
    %v72 = vld [vmem:[#allocation7 + $0x50] sm:$0xff]
    %v73 = vld [vmem:[#allocation7 + $0x58] sm:$0xff]
    %v74 = vld [vmem:[#allocation7 + $0x60] sm:$0xff]
    %v75 = vld [vmem:[#allocation7 + $0x68] sm:$0xff]
    %v76 = vld [vmem:[#allocation7 + $0x70] sm:$0xff]
    %v77 = vld [vmem:[#allocation7 + $0x78] sm:$0xff]
    %v78 = vand.u32 %v77, 4294901760
    %79 = vmatpush.msra.mxu0 %v78
    %v80 = vand.u32 %v76, 4294901760
    %81 = vmatpush.msra.mxu0 %v80
    %v82 = vand.u32 %v75, 4294901760
    %83 = vmatpush.msra.mxu0 %v82
    %v84 = vand.u32 %v74, 4294901760
    %85 = vmatpush.msra.mxu0 %v84
    %v86 = vand.u32 %v73, 4294901760
    %87 = vmatpush.msra.mxu0 %v86
    %v88 = vand.u32 %v72, 4294901760
    %89 = vmatpush.msra.mxu0 %v88
    %v90 = vand.u32 %v71, 4294901760
    %91 = vmatpush.msra.mxu0 %v90
    %v92 = vand.u32 %v70, 4294901760
    %93 = vmatpush.msra.mxu0 %v92
    %v94 = vand.u32 %v69, 4294901760
    %95 = vmatpush.msra.mxu0 %v94
    %v96 = vand.u32 %v68, 4294901760
    %97 = vmatpush.msra.mxu0 %v96
    %v98 = vand.u32 %v67, 4294901760
    %99 = vmatpush.msra.mxu0 %v98
    %v100 = vand.u32 %v66, 4294901760
    %101 = vmatpush.msra.mxu0 %v100
    %v102 = vand.u32 %v65, 4294901760
    %103 = vmatpush.msra.mxu0 %v102
    %v104 = vand.u32 %v64, 4294901760
    %105 = vmatpush.msra.mxu0 %v104
    %v106 = vand.u32 %v63, 4294901760
    %107 = vmatpush.msra.mxu0 %v106
    %v108 = vand.u32 %v62, 4294901760
    %109 = vmatpush.msra.mxu0 %v108
    %v110 = vand.u32 %v61, 4294901760
    %v111 = vsub.f32 %v61, %v110
    %v112 = vand.u32 %v111, 4294901760
    %v113 = vsub.f32 %v111, %v112
    %v114 = vand.u32 %v113, 4294901760
    %115 = vmatmul.f32.gmra.mxu0 %v114
    %v116 = vpop.f32.mrf.mxu0
    %v117 = vadd.f32 0.0, %v116
    %118 = vdwg.mxu0
    %v119 = vand.u32 %v77, 4294901760
    %v120 = vsub.f32 %v77, %v119
    %v121 = vand.u32 %v120, 4294901760
    %v122 = vsub.f32 %v120, %v121
    %v123 = vand.u32 %v122, 4294901760
    %124 = vmatpush.msra.mxu0 %v123
    %v125 = vand.u32 %v76, 4294901760
    %v126 = vsub.f32 %v76, %v125
    %v127 = vand.u32 %v126, 4294901760
    %v128 = vsub.f32 %v126, %v127
    %v129 = vand.u32 %v128, 4294901760
    %130 = vmatpush.msra.mxu0 %v129
    %v131 = vand.u32 %v75, 4294901760
    %v132 = vsub.f32 %v75, %v131
    %v133 = vand.u32 %v132, 4294901760
    %v134 = vsub.f32 %v132, %v133
    %v135 = vand.u32 %v134, 4294901760
    %136 = vmatpush.msra.mxu0 %v135
    %v137 = vand.u32 %v74, 4294901760
    %v138 = vsub.f32 %v74, %v137
    %v139 = vand.u32 %v138, 4294901760
    %v140 = vsub.f32 %v138, %v139
    %v141 = vand.u32 %v140, 4294901760
    %142 = vmatpush.msra.mxu0 %v141
    %v143 = vand.u32 %v73, 4294901760
    %v144 = vsub.f32 %v73, %v143
    %v145 = vand.u32 %v144, 4294901760
    %v146 = vsub.f32 %v144, %v145
    %v147 = vand.u32 %v146, 4294901760
    %148 = vmatpush.msra.mxu0 %v147
    %v149 = vand.u32 %v72, 4294901760
    %v150 = vsub.f32 %v72, %v149
    %v151 = vand.u32 %v150, 4294901760
    %v152 = vsub.f32 %v150, %v151
    %v153 = vand.u32 %v152, 4294901760
    %154 = vmatpush.msra.mxu0 %v153
    %v155 = vand.u32 %v71, 4294901760
    %v156 = vsub.f32 %v71, %v155
    %v157 = vand.u32 %v156, 4294901760
    %v158 = vsub.f32 %v156, %v157
    %v159 = vand.u32 %v158, 4294901760
    %160 = vmatpush.msra.mxu0 %v159
    %v161 = vand.u32 %v70, 4294901760
    %v162 = vsub.f32 %v70, %v161
    %v163 = vand.u32 %v162, 4294901760
    %v164 = vsub.f32 %v162, %v163
    %v165 = vand.u32 %v164, 4294901760
    %166 = vmatpush.msra.mxu0 %v165
    %v167 = vand.u32 %v69, 4294901760
    %v168 = vsub.f32 %v69, %v167
    %v169 = vand.u32 %v168, 4294901760
    %v170 = vsub.f32 %v168, %v169
    %v171 = vand.u32 %v170, 4294901760
    %172 = vmatpush.msra.mxu0 %v171
    %v173 = vand.u32 %v68, 4294901760
    %v174 = vsub.f32 %v68, %v173
    %v175 = vand.u32 %v174, 4294901760
    %v176 = vsub.f32 %v174, %v175
    %v177 = vand.u32 %v176, 4294901760
    %178 = vmatpush.msra.mxu0 %v177
    %v179 = vand.u32 %v67, 4294901760
    %v180 = vsub.f32 %v67, %v179
    %v181 = vand.u32 %v180, 4294901760
    %v182 = vsub.f32 %v180, %v181
    %v183 = vand.u32 %v182, 4294901760
    %184 = vmatpush.msra.mxu0 %v183
    %v185 = vand.u32 %v66, 4294901760
    %v186 = vsub.f32 %v66, %v185
    %v187 = vand.u32 %v186, 4294901760
    %v188 = vsub.f32 %v186, %v187
    %v189 = vand.u32 %v188, 4294901760
    %190 = vmatpush.msra.mxu0 %v189
    %v191 = vand.u32 %v65, 4294901760
    %v192 = vsub.f32 %v65, %v191
    %v193 = vand.u32 %v192, 4294901760
    %v194 = vsub.f32 %v192, %v193
    %v195 = vand.u32 %v194, 4294901760
    %196 = vmatpush.msra.mxu0 %v195
    %v197 = vand.u32 %v64, 4294901760
    %v198 = vsub.f32 %v64, %v197
    %v199 = vand.u32 %v198, 4294901760
    %v200 = vsub.f32 %v198, %v199
    %v201 = vand.u32 %v200, 4294901760
    %202 = vmatpush.msra.mxu0 %v201
    %v203 = vand.u32 %v63, 4294901760
    %v204 = vsub.f32 %v63, %v203
    %v205 = vand.u32 %v204, 4294901760
    %v206 = vsub.f32 %v204, %v205
    %v207 = vand.u32 %v206, 4294901760
    %208 = vmatpush.msra.mxu0 %v207
    %v209 = vand.u32 %v62, 4294901760
    %v210 = vsub.f32 %v62, %v209
    %v211 = vand.u32 %v210, 4294901760
    %v212 = vsub.f32 %v210, %v211
    %v213 = vand.u32 %v212, 4294901760
    %214 = vmatpush.msra.mxu0 %v213
    %v215 = vand.u32 %v61, 4294901760
    %216 = vmatmul.f32.gmra.mxu0 %v215
    %v217 = vpop.f32.mrf.mxu0
    %v218 = vadd.f32 %v117, %v217
    %219 = vdwg.mxu0
    %v220 = vand.u32 %v77, 4294901760
    %v221 = vsub.f32 %v77, %v220
    %222 = vmatpush.msra.mxu0 %v221
    %v223 = vand.u32 %v76, 4294901760
    %v224 = vsub.f32 %v76, %v223
    %225 = vmatpush.msra.mxu0 %v224
    %v226 = vand.u32 %v75, 4294901760
    %v227 = vsub.f32 %v75, %v226
    %228 = vmatpush.msra.mxu0 %v227
    %v229 = vand.u32 %v74, 4294901760
    %v230 = vsub.f32 %v74, %v229
    %231 = vmatpush.msra.mxu0 %v230
    %v232 = vand.u32 %v73, 4294901760
    %v233 = vsub.f32 %v73, %v232
    %234 = vmatpush.msra.mxu0 %v233
    %v235 = vand.u32 %v72, 4294901760
    %v236 = vsub.f32 %v72, %v235
    %237 = vmatpush.msra.mxu0 %v236
    %v238 = vand.u32 %v71, 4294901760
    %v239 = vsub.f32 %v71, %v238
    %240 = vmatpush.msra.mxu0 %v239
    %v241 = vand.u32 %v70, 4294901760
    %v242 = vsub.f32 %v70, %v241
    %243 = vmatpush.msra.mxu0 %v242
    %v244 = vand.u32 %v69, 4294901760
    %v245 = vsub.f32 %v69, %v244
    %246 = vmatpush.msra.mxu0 %v245
    %v247 = vand.u32 %v68, 4294901760
    %v248 = vsub.f32 %v68, %v247
    %249 = vmatpush.msra.mxu0 %v248
    %v250 = vand.u32 %v67, 4294901760
    %v251 = vsub.f32 %v67, %v250
    %252 = vmatpush.msra.mxu0 %v251
    %v253 = vand.u32 %v66, 4294901760
    %v254 = vsub.f32 %v66, %v253
    %255 = vmatpush.msra.mxu0 %v254
    %v256 = vand.u32 %v65, 4294901760
    %v257 = vsub.f32 %v65, %v256
    %258 = vmatpush.msra.mxu0 %v257
    %v259 = vand.u32 %v64, 4294901760
    %v260 = vsub.f32 %v64, %v259
    %261 = vmatpush.msra.mxu0 %v260
    %v262 = vand.u32 %v63, 4294901760
    %v263 = vsub.f32 %v63, %v262
    %264 = vmatpush.msra.mxu0 %v263
    %v265 = vand.u32 %v62, 4294901760
    %v266 = vsub.f32 %v62, %v265
    %267 = vmatpush.msra.mxu0 %v266
    %v268 = vand.u32 %v61, 4294901760
    %v269 = vsub.f32 %v61, %v268
    %270 = vmatmul.f32.gmra.mxu0 %v269
    %v271 = vpop.f32.mrf.mxu0
    %v272 = vadd.f32 %v218, %v271
    %273 = vdwg.mxu0
    %v274 = vand.u32 %v77, 4294901760
    %275 = vmatpush.msra.mxu0 %v274
    %v276 = vand.u32 %v76, 4294901760
    %277 = vmatpush.msra.mxu0 %v276
    %v278 = vand.u32 %v75, 4294901760
    %279 = vmatpush.msra.mxu0 %v278
    %v280 = vand.u32 %v74, 4294901760
    %281 = vmatpush.msra.mxu0 %v280
    %v282 = vand.u32 %v73, 4294901760
    %283 = vmatpush.msra.mxu0 %v282
    %v284 = vand.u32 %v72, 4294901760
    %285 = vmatpush.msra.mxu0 %v284
    %v286 = vand.u32 %v71, 4294901760
    %287 = vmatpush.msra.mxu0 %v286
    %v288 = vand.u32 %v70, 4294901760
    %289 = vmatpush.msra.mxu0 %v288
    %v290 = vand.u32 %v69, 4294901760
    %291 = vmatpush.msra.mxu0 %v290
    %v292 = vand.u32 %v68, 4294901760
    %293 = vmatpush.msra.mxu0 %v292
    %v294 = vand.u32 %v67, 4294901760
    %295 = vmatpush.msra.mxu0 %v294
    %v296 = vand.u32 %v66, 4294901760
    %297 = vmatpush.msra.mxu0 %v296
    %v298 = vand.u32 %v65, 4294901760
    %299 = vmatpush.msra.mxu0 %v298
    %v300 = vand.u32 %v64, 4294901760
    %301 = vmatpush.msra.mxu0 %v300
    %v302 = vand.u32 %v63, 4294901760
    %303 = vmatpush.msra.mxu0 %v302
    %v304 = vand.u32 %v62, 4294901760
    %305 = vmatpush.msra.mxu0 %v304
    %v306 = vand.u32 %v61, 4294901760
    %v307 = vsub.f32 %v61, %v306
    %v308 = vand.u32 %v307, 4294901760
    %309 = vmatmul.f32.gmra.mxu0 %v308
    %v310 = vpop.f32.mrf.mxu0
    %v311 = vadd.f32 %v272, %v310
    %312 = vdwg.mxu0
    %v313 = vand.u32 %v77, 4294901760
    %v314 = vsub.f32 %v77, %v313
    %v315 = vand.u32 %v314, 4294901760
    %316 = vmatpush.msra.mxu0 %v315
    %v317 = vand.u32 %v76, 4294901760
    %v318 = vsub.f32 %v76, %v317
    %v319 = vand.u32 %v318, 4294901760
    %320 = vmatpush.msra.mxu0 %v319
    %v321 = vand.u32 %v75, 4294901760
    %v322 = vsub.f32 %v75, %v321
    %v323 = vand.u32 %v322, 4294901760
    %324 = vmatpush.msra.mxu0 %v323
    %v325 = vand.u32 %v74, 4294901760
    %v326 = vsub.f32 %v74, %v325
    %v327 = vand.u32 %v326, 4294901760
    %328 = vmatpush.msra.mxu0 %v327
    %v329 = vand.u32 %v73, 4294901760
    %v330 = vsub.f32 %v73, %v329
    %v331 = vand.u32 %v330, 4294901760
    %332 = vmatpush.msra.mxu0 %v331
    %v333 = vand.u32 %v72, 4294901760
    %v334 = vsub.f32 %v72, %v333
    %v335 = vand.u32 %v334, 4294901760
    %336 = vmatpush.msra.mxu0 %v335
    %v337 = vand.u32 %v71, 4294901760
    %v338 = vsub.f32 %v71, %v337
    %v339 = vand.u32 %v338, 4294901760
    %340 = vmatpush.msra.mxu0 %v339
    %v341 = vand.u32 %v70, 4294901760
    %v342 = vsub.f32 %v70, %v341
    %v343 = vand.u32 %v342, 4294901760
    %344 = vmatpush.msra.mxu0 %v343
    %v345 = vand.u32 %v69, 4294901760
    %v346 = vsub.f32 %v69, %v345
    %v347 = vand.u32 %v346, 4294901760
    %348 = vmatpush.msra.mxu0 %v347
    %v349 = vand.u32 %v68, 4294901760
    %v350 = vsub.f32 %v68, %v349
    %v351 = vand.u32 %v350, 4294901760
    %352 = vmatpush.msra.mxu0 %v351
    %v353 = vand.u32 %v67, 4294901760
    %v354 = vsub.f32 %v67, %v353
    %v355 = vand.u32 %v354, 4294901760
    %356 = vmatpush.msra.mxu0 %v355
    %v357 = vand.u32 %v66, 4294901760
    %v358 = vsub.f32 %v66, %v357
    %v359 = vand.u32 %v358, 4294901760
    %360 = vmatpush.msra.mxu0 %v359
    %v361 = vand.u32 %v65, 4294901760
    %v362 = vsub.f32 %v65, %v361
    %v363 = vand.u32 %v362, 4294901760
    %364 = vmatpush.msra.mxu0 %v363
    %v365 = vand.u32 %v64, 4294901760
    %v366 = vsub.f32 %v64, %v365
    %v367 = vand.u32 %v366, 4294901760
    %368 = vmatpush.msra.mxu0 %v367
    %v369 = vand.u32 %v63, 4294901760
    %v370 = vsub.f32 %v63, %v369
    %v371 = vand.u32 %v370, 4294901760
    %372 = vmatpush.msra.mxu0 %v371
    %v373 = vand.u32 %v62, 4294901760
    %v374 = vsub.f32 %v62, %v373
    %v375 = vand.u32 %v374, 4294901760
    %376 = vmatpush.msra.mxu0 %v375
    %v377 = vand.u32 %v61, 4294901760
    %378 = vmatmul.f32.gmra.mxu0 %v377
    %v379 = vpop.f32.mrf.mxu0
    %v380 = vadd.f32 %v311, %v379
    %381 = vdwg.mxu0
    %v382 = vand.u32 %v77, 4294901760
    %383 = vmatpush.msra.mxu0 %v382
    %v384 = vand.u32 %v76, 4294901760
    %385 = vmatpush.msra.mxu0 %v384
    %v386 = vand.u32 %v75, 4294901760
    %387 = vmatpush.msra.mxu0 %v386
    %v388 = vand.u32 %v74, 4294901760
    %389 = vmatpush.msra.mxu0 %v388
    %v390 = vand.u32 %v73, 4294901760
    %391 = vmatpush.msra.mxu0 %v390
    %v392 = vand.u32 %v72, 4294901760
    %393 = vmatpush.msra.mxu0 %v392
    %v394 = vand.u32 %v71, 4294901760
    %395 = vmatpush.msra.mxu0 %v394
    %v396 = vand.u32 %v70, 4294901760
    %397 = vmatpush.msra.mxu0 %v396
    %v398 = vand.u32 %v69, 4294901760
    %399 = vmatpush.msra.mxu0 %v398
    %v400 = vand.u32 %v68, 4294901760
    %401 = vmatpush.msra.mxu0 %v400
    %v402 = vand.u32 %v67, 4294901760
    %403 = vmatpush.msra.mxu0 %v402
    %v404 = vand.u32 %v66, 4294901760
    %405 = vmatpush.msra.mxu0 %v404
    %v406 = vand.u32 %v65, 4294901760
    %407 = vmatpush.msra.mxu0 %v406
    %v408 = vand.u32 %v64, 4294901760
    %409 = vmatpush.msra.mxu0 %v408
    %v410 = vand.u32 %v63, 4294901760
    %411 = vmatpush.msra.mxu0 %v410
    %v412 = vand.u32 %v62, 4294901760
    %413 = vmatpush.msra.mxu0 %v412
    %v414 = vand.u32 %v61, 4294901760
    %415 = vmatmul.f32.gmra.mxu0 %v414
    %v416 = vpop.f32.mrf.mxu0
    %v417 = vadd.f32 %v380, %v416
    %418 = vdwg.mxu0
    %v419 = vmul.f32 %v417, 0.03125
    %v420 = vsub.f32 %v61, %v419
    %v421 = vmul.f32 %v420, %v420
    %v422 = vand.u32 %v77, 4294901760
    %423 = vmatpush.msra.mxu0 %v422
    %v424 = vand.u32 %v76, 4294901760
    %425 = vmatpush.msra.mxu0 %v424
    %v426 = vand.u32 %v75, 4294901760
    %427 = vmatpush.msra.mxu0 %v426
    %v428 = vand.u32 %v74, 4294901760
    %429 = vmatpush.msra.mxu0 %v428
    %v430 = vand.u32 %v73, 4294901760
    %431 = vmatpush.msra.mxu0 %v430
    %v432 = vand.u32 %v72, 4294901760
    %433 = vmatpush.msra.mxu0 %v432
    %v434 = vand.u32 %v71, 4294901760
    %435 = vmatpush.msra.mxu0 %v434
    %v436 = vand.u32 %v70, 4294901760
    %437 = vmatpush.msra.mxu0 %v436
    %v438 = vand.u32 %v69, 4294901760
    %439 = vmatpush.msra.mxu0 %v438
    %v440 = vand.u32 %v68, 4294901760
    %441 = vmatpush.msra.mxu0 %v440
    %v442 = vand.u32 %v67, 4294901760
    %443 = vmatpush.msra.mxu0 %v442
    %v444 = vand.u32 %v66, 4294901760
    %445 = vmatpush.msra.mxu0 %v444
    %v446 = vand.u32 %v65, 4294901760
    %447 = vmatpush.msra.mxu0 %v446
    %v448 = vand.u32 %v64, 4294901760
    %449 = vmatpush.msra.mxu0 %v448
    %v450 = vand.u32 %v63, 4294901760
    %451 = vmatpush.msra.mxu0 %v450
    %v452 = vand.u32 %v62, 4294901760
    %453 = vmatpush.msra.mxu0 %v452
    %v454 = vand.u32 %v421, 4294901760
    %v455 = vsub.f32 %v421, %v454
    %v456 = vand.u32 %v455, 4294901760
    %v457 = vsub.f32 %v455, %v456
    %v458 = vand.u32 %v457, 4294901760
    %459 = vmatmul.f32.gmra.mxu0 %v458
    %v460 = vpop.f32.mrf.mxu0
    %v461 = vadd.f32 0.0, %v460
    %462 = vdwg.mxu0
    %v463 = vand.u32 %v77, 4294901760
    %v464 = vsub.f32 %v77, %v463
    %v465 = vand.u32 %v464, 4294901760
    %v466 = vsub.f32 %v464, %v465
    %v467 = vand.u32 %v466, 4294901760
    %468 = vmatpush.msra.mxu0 %v467
    %v469 = vand.u32 %v76, 4294901760
    %v470 = vsub.f32 %v76, %v469
    %v471 = vand.u32 %v470, 4294901760
    %v472 = vsub.f32 %v470, %v471
    %v473 = vand.u32 %v472, 4294901760
    %474 = vmatpush.msra.mxu0 %v473
    %v475 = vand.u32 %v75, 4294901760
    %v476 = vsub.f32 %v75, %v475
    %v477 = vand.u32 %v476, 4294901760
    %v478 = vsub.f32 %v476, %v477
    %v479 = vand.u32 %v478, 4294901760
    %480 = vmatpush.msra.mxu0 %v479
    %v481 = vand.u32 %v74, 4294901760
    %v482 = vsub.f32 %v74, %v481
    %v483 = vand.u32 %v482, 4294901760
    %v484 = vsub.f32 %v482, %v483
    %v485 = vand.u32 %v484, 4294901760
    %486 = vmatpush.msra.mxu0 %v485
    %v487 = vand.u32 %v73, 4294901760
    %v488 = vsub.f32 %v73, %v487
    %v489 = vand.u32 %v488, 4294901760
    %v490 = vsub.f32 %v488, %v489
    %v491 = vand.u32 %v490, 4294901760
    %492 = vmatpush.msra.mxu0 %v491
    %v493 = vand.u32 %v72, 4294901760
    %v494 = vsub.f32 %v72, %v493
    %v495 = vand.u32 %v494, 4294901760
    %v496 = vsub.f32 %v494, %v495
    %v497 = vand.u32 %v496, 4294901760
    %498 = vmatpush.msra.mxu0 %v497
    %v499 = vand.u32 %v71, 4294901760
    %v500 = vsub.f32 %v71, %v499
    %v501 = vand.u32 %v500, 4294901760
    %v502 = vsub.f32 %v500, %v501
    %v503 = vand.u32 %v502, 4294901760
    %504 = vmatpush.msra.mxu0 %v503
    %v505 = vand.u32 %v70, 4294901760
    %v506 = vsub.f32 %v70, %v505
    %v507 = vand.u32 %v506, 4294901760
    %v508 = vsub.f32 %v506, %v507
    %v509 = vand.u32 %v508, 4294901760
    %510 = vmatpush.msra.mxu0 %v509
    %v511 = vand.u32 %v69, 4294901760
    %v512 = vsub.f32 %v69, %v511
    %v513 = vand.u32 %v512, 4294901760
    %v514 = vsub.f32 %v512, %v513
    %v515 = vand.u32 %v514, 4294901760
    %516 = vmatpush.msra.mxu0 %v515
    %v517 = vand.u32 %v68, 4294901760
    %v518 = vsub.f32 %v68, %v517
    %v519 = vand.u32 %v518, 4294901760
    %v520 = vsub.f32 %v518, %v519
    %v521 = vand.u32 %v520, 4294901760
    %522 = vmatpush.msra.mxu0 %v521
    %v523 = vand.u32 %v67, 4294901760
    %v524 = vsub.f32 %v67, %v523
    %v525 = vand.u32 %v524, 4294901760
    %v526 = vsub.f32 %v524, %v525
    %v527 = vand.u32 %v526, 4294901760
    %528 = vmatpush.msra.mxu0 %v527
    %v529 = vand.u32 %v66, 4294901760
    %v530 = vsub.f32 %v66, %v529
    %v531 = vand.u32 %v530, 4294901760
    %v532 = vsub.f32 %v530, %v531
    %v533 = vand.u32 %v532, 4294901760
    %534 = vmatpush.msra.mxu0 %v533
    %v535 = vand.u32 %v65, 4294901760
    %v536 = vsub.f32 %v65, %v535
    %v537 = vand.u32 %v536, 4294901760
    %v538 = vsub.f32 %v536, %v537
    %v539 = vand.u32 %v538, 4294901760
    %540 = vmatpush.msra.mxu0 %v539
    %v541 = vand.u32 %v64, 4294901760
    %v542 = vsub.f32 %v64, %v541
    %v543 = vand.u32 %v542, 4294901760
    %v544 = vsub.f32 %v542, %v543
    %v545 = vand.u32 %v544, 4294901760
    %546 = vmatpush.msra.mxu0 %v545
    %v547 = vand.u32 %v63, 4294901760
    %v548 = vsub.f32 %v63, %v547
    %v549 = vand.u32 %v548, 4294901760
    %v550 = vsub.f32 %v548, %v549
    %v551 = vand.u32 %v550, 4294901760
    %552 = vmatpush.msra.mxu0 %v551
    %v553 = vand.u32 %v62, 4294901760
    %v554 = vsub.f32 %v62, %v553
    %v555 = vand.u32 %v554, 4294901760
    %v556 = vsub.f32 %v554, %v555
    %v557 = vand.u32 %v556, 4294901760
    %558 = vmatpush.msra.mxu0 %v557
    %v559 = vand.u32 %v421, 4294901760
    %560 = vmatmul.f32.gmra.mxu0 %v559
    %v561 = vpop.f32.mrf.mxu0
    %v562 = vadd.f32 %v461, %v561
    %563 = vdwg.mxu0
    %v564 = vand.u32 %v77, 4294901760
    %v565 = vsub.f32 %v77, %v564
    %566 = vmatpush.msra.mxu0 %v565
    %v567 = vand.u32 %v76, 4294901760
    %v568 = vsub.f32 %v76, %v567
    %569 = vmatpush.msra.mxu0 %v568
    %v570 = vand.u32 %v75, 4294901760
    %v571 = vsub.f32 %v75, %v570
    %572 = vmatpush.msra.mxu0 %v571
    %v573 = vand.u32 %v74, 4294901760
    %v574 = vsub.f32 %v74, %v573
    %575 = vmatpush.msra.mxu0 %v574
    %v576 = vand.u32 %v73, 4294901760
    %v577 = vsub.f32 %v73, %v576
    %578 = vmatpush.msra.mxu0 %v577
    %v579 = vand.u32 %v72, 4294901760
    %v580 = vsub.f32 %v72, %v579
    %581 = vmatpush.msra.mxu0 %v580
    %v582 = vand.u32 %v71, 4294901760
    %v583 = vsub.f32 %v71, %v582
    %584 = vmatpush.msra.mxu0 %v583
    %v585 = vand.u32 %v70, 4294901760
    %v586 = vsub.f32 %v70, %v585
    %587 = vmatpush.msra.mxu0 %v586
    %v588 = vand.u32 %v69, 4294901760
    %v589 = vsub.f32 %v69, %v588
    %590 = vmatpush.msra.mxu0 %v589
    %v591 = vand.u32 %v68, 4294901760
    %v592 = vsub.f32 %v68, %v591
    %593 = vmatpush.msra.mxu0 %v592
    %v594 = vand.u32 %v67, 4294901760
    %v595 = vsub.f32 %v67, %v594
    %596 = vmatpush.msra.mxu0 %v595
    %v597 = vand.u32 %v66, 4294901760
    %v598 = vsub.f32 %v66, %v597
    %599 = vmatpush.msra.mxu0 %v598
    %v600 = vand.u32 %v65, 4294901760
    %v601 = vsub.f32 %v65, %v600
    %602 = vmatpush.msra.mxu0 %v601
    %v603 = vand.u32 %v64, 4294901760
    %v604 = vsub.f32 %v64, %v603
    %605 = vmatpush.msra.mxu0 %v604
    %v606 = vand.u32 %v63, 4294901760
    %v607 = vsub.f32 %v63, %v606
    %608 = vmatpush.msra.mxu0 %v607
    %v609 = vand.u32 %v62, 4294901760
    %v610 = vsub.f32 %v62, %v609
    %611 = vmatpush.msra.mxu0 %v610
    %v612 = vand.u32 %v421, 4294901760
    %v613 = vsub.f32 %v421, %v612
    %614 = vmatmul.f32.gmra.mxu0 %v613
    %v615 = vpop.f32.mrf.mxu0
    %v616 = vadd.f32 %v562, %v615
    %617 = vdwg.mxu0
    %v618 = vand.u32 %v77, 4294901760
    %619 = vmatpush.msra.mxu0 %v618
    %v620 = vand.u32 %v76, 4294901760
    %621 = vmatpush.msra.mxu0 %v620
    %v622 = vand.u32 %v75, 4294901760
    %623 = vmatpush.msra.mxu0 %v622
    %v624 = vand.u32 %v74, 4294901760
    %625 = vmatpush.msra.mxu0 %v624
    %v626 = vand.u32 %v73, 4294901760
    %627 = vmatpush.msra.mxu0 %v626
    %v628 = vand.u32 %v72, 4294901760
    %629 = vmatpush.msra.mxu0 %v628
    %v630 = vand.u32 %v71, 4294901760
    %631 = vmatpush.msra.mxu0 %v630
    %v632 = vand.u32 %v70, 4294901760
    %633 = vmatpush.msra.mxu0 %v632
    %v634 = vand.u32 %v69, 4294901760
    %635 = vmatpush.msra.mxu0 %v634
    %v636 = vand.u32 %v68, 4294901760
    %637 = vmatpush.msra.mxu0 %v636
    %v638 = vand.u32 %v67, 4294901760
    %639 = vmatpush.msra.mxu0 %v638
    %v640 = vand.u32 %v66, 4294901760
    %641 = vmatpush.msra.mxu0 %v640
    %v642 = vand.u32 %v65, 4294901760
    %643 = vmatpush.msra.mxu0 %v642
    %v644 = vand.u32 %v64, 4294901760
    %645 = vmatpush.msra.mxu0 %v644
    %v646 = vand.u32 %v63, 4294901760
    %647 = vmatpush.msra.mxu0 %v646
    %v648 = vand.u32 %v62, 4294901760
    %649 = vmatpush.msra.mxu0 %v648
    %v650 = vand.u32 %v421, 4294901760
    %v651 = vsub.f32 %v421, %v650
    %v652 = vand.u32 %v651, 4294901760
    %653 = vmatmul.f32.gmra.mxu0 %v652
    %v654 = vpop.f32.mrf.mxu0
    %v655 = vadd.f32 %v616, %v654
    %656 = vdwg.mxu0
    %v657 = vand.u32 %v77, 4294901760
    %v658 = vsub.f32 %v77, %v657
    %v659 = vand.u32 %v658, 4294901760
    %660 = vmatpush.msra.mxu0 %v659
    %v661 = vand.u32 %v76, 4294901760
    %v662 = vsub.f32 %v76, %v661
    %v663 = vand.u32 %v662, 4294901760
    %664 = vmatpush.msra.mxu0 %v663
    %v665 = vand.u32 %v75, 4294901760
    %v666 = vsub.f32 %v75, %v665
    %v667 = vand.u32 %v666, 4294901760
    %668 = vmatpush.msra.mxu0 %v667
    %v669 = vand.u32 %v74, 4294901760
    %v670 = vsub.f32 %v74, %v669
    %v671 = vand.u32 %v670, 4294901760
    %672 = vmatpush.msra.mxu0 %v671
    %v673 = vand.u32 %v73, 4294901760
    %v674 = vsub.f32 %v73, %v673
    %v675 = vand.u32 %v674, 4294901760
    %676 = vmatpush.msra.mxu0 %v675
    %v677 = vand.u32 %v72, 4294901760
    %v678 = vsub.f32 %v72, %v677
    %v679 = vand.u32 %v678, 4294901760
    %680 = vmatpush.msra.mxu0 %v679
    %v681 = vand.u32 %v71, 4294901760
    %v682 = vsub.f32 %v71, %v681
    %v683 = vand.u32 %v682, 4294901760
    %684 = vmatpush.msra.mxu0 %v683
    %v685 = vand.u32 %v70, 4294901760
    %v686 = vsub.f32 %v70, %v685
    %v687 = vand.u32 %v686, 4294901760
    %688 = vmatpush.msra.mxu0 %v687
    %v689 = vand.u32 %v69, 4294901760
    %v690 = vsub.f32 %v69, %v689
    %v691 = vand.u32 %v690, 4294901760
    %692 = vmatpush.msra.mxu0 %v691
    %v693 = vand.u32 %v68, 4294901760
    %v694 = vsub.f32 %v68, %v693
    %v695 = vand.u32 %v694, 4294901760
    %696 = vmatpush.msra.mxu0 %v695
    %v697 = vand.u32 %v67, 4294901760
    %v698 = vsub.f32 %v67, %v697
    %v699 = vand.u32 %v698, 4294901760
    %700 = vmatpush.msra.mxu0 %v699
    %v701 = vand.u32 %v66, 4294901760
    %v702 = vsub.f32 %v66, %v701
    %v703 = vand.u32 %v702, 4294901760
    %704 = vmatpush.msra.mxu0 %v703
    %v705 = vand.u32 %v65, 4294901760
    %v706 = vsub.f32 %v65, %v705
    %v707 = vand.u32 %v706, 4294901760
    %708 = vmatpush.msra.mxu0 %v707
    %v709 = vand.u32 %v64, 4294901760
    %v710 = vsub.f32 %v64, %v709
    %v711 = vand.u32 %v710, 4294901760
    %712 = vmatpush.msra.mxu0 %v711
    %v713 = vand.u32 %v63, 4294901760
    %v714 = vsub.f32 %v63, %v713
    %v715 = vand.u32 %v714, 4294901760
    %716 = vmatpush.msra.mxu0 %v715
    %v717 = vand.u32 %v62, 4294901760
    %v718 = vsub.f32 %v62, %v717
    %v719 = vand.u32 %v718, 4294901760
    %720 = vmatpush.msra.mxu0 %v719
    %v721 = vand.u32 %v421, 4294901760
    %722 = vmatmul.f32.gmra.mxu0 %v721
    %v723 = vpop.f32.mrf.mxu0
    %v724 = vadd.f32 %v655, %v723
    %725 = vdwg.mxu0
    %v726 = vand.u32 %v77, 4294901760
    %727 = vmatpush.msra.mxu0 %v726
    %v728 = vand.u32 %v76, 4294901760
    %729 = vmatpush.msra.mxu0 %v728
    %v730 = vand.u32 %v75, 4294901760
    %731 = vmatpush.msra.mxu0 %v730
    %v732 = vand.u32 %v74, 4294901760
    %733 = vmatpush.msra.mxu0 %v732
    %v734 = vand.u32 %v73, 4294901760
    %735 = vmatpush.msra.mxu0 %v734
    %v736 = vand.u32 %v72, 4294901760
    %737 = vmatpush.msra.mxu0 %v736
    %v738 = vand.u32 %v71, 4294901760
    %739 = vmatpush.msra.mxu0 %v738
    %v740 = vand.u32 %v70, 4294901760
    %741 = vmatpush.msra.mxu0 %v740
    %v742 = vand.u32 %v69, 4294901760
    %743 = vmatpush.msra.mxu0 %v742
    %v744 = vand.u32 %v68, 4294901760
    %745 = vmatpush.msra.mxu0 %v744
    %v746 = vand.u32 %v67, 4294901760
    %747 = vmatpush.msra.mxu0 %v746
    %v748 = vand.u32 %v66, 4294901760
    %749 = vmatpush.msra.mxu0 %v748
    %v750 = vand.u32 %v65, 4294901760
    %751 = vmatpush.msra.mxu0 %v750
    %v752 = vand.u32 %v64, 4294901760
    %753 = vmatpush.msra.mxu0 %v752
    %v754 = vand.u32 %v63, 4294901760
    %755 = vmatpush.msra.mxu0 %v754
    %v756 = vand.u32 %v62, 4294901760
    %757 = vmatpush.msra.mxu0 %v756
    %v758 = vand.u32 %v421, 4294901760
    %759 = vmatmul.f32.gmra.mxu0 %v758
    %v760 = vpop.f32.mrf.mxu0
    %v761 = vadd.f32 %v724, %v760
    %762 = vdwg.mxu0
    %v763 = vmul.f32 %v761, 0.03125
    %v764 = vadd.f32 %v763, 1e-12
    %v765 = vrsqrt.pop %v764
    %v766 = vmul.f32 %v765, %v764
    %v767 = vmul.f32 %v766, %v765
    %v768 = vmul.f32 0.5, %v767
    %v769 = vsub.f32 1.5, %v768
    %v770 = vmul.f32 %v765, %v769
    %vm771 = vweird.f32 %v764
    %vm772 = vweird.f32 %v765
    %vm773 = vmor %vm771, %vm772
    %v774 = vsel %vm773, %v765, %v770
    %v775 = vld [vmem:[#allocation5] sm:$0x1]
    %v776 = vmul.f32 %v420, %v774
    %v778 = vperm.slane %v775, 0
    %v780 = vmul.f32 %v778, %v776
    %v781 = vld [vmem:[%s2] sm:$0x1]
    %v783 = vperm.slane %v781, 0
    %v785 = vadd.f32 %v780, %v783
    %786 = vst [vmem:[#allocation8] sm:$0xf] %v785
    // Predicated region
    $region30: #{tpu_custom_call.1} parent=1 // pred_check
      _
    $region31: #{tpu_custom_call.1} parent=1 // pred_check_branch
      %788 = sbr.rel (0) target = $region33
    $region32: #{tpu_custom_call.1} parent=1 // pred_region
      %790 = vsyncadd [#allocation4], 0
      %s792 = sshll.u32 [#allocation8], 4
      %s793 = int_to_ptr.vmem [resolvable:$true] %s792
      %s794 = sshll.u32 %s4, 4
      %s795 = int_to_ptr.hbm [resolvable:$true] %s794
      %797 = dma.vmem_to_hbm [thread:$0]  %s793, 64, %s795, [#allocation4]
    $region33: #{tpu_custom_call.1} parent=1 // pred_fallthru
      _
    // Predicated region
    $region34: #{tpu_custom_call.1} parent=1 // pred_check
      _
    $region35: #{tpu_custom_call.1} parent=1 // pred_check_branch
      %799 = sbr.rel (0) target = $region37
    $region36: #{tpu_custom_call.1} parent=1 // pred_region
      %801 = dma.done [#allocation4], 64
    $region37: #{tpu_custom_call.1} parent=1 // pred_fallthru
      _
    %802 = vsyncpa [#allocation3], 1
    %803 = vsyncpa [#allocation6], 1
    %804 = vsyncpa [#allocation4], 1

</llo_original>
